<compile_context>
chip_gen: v5e
topology: v5e:2x2
jax: 0.10.0
libtpu: 0.0.40
codegen_flags: <defaults>
</compile_context>

<pallas_src>
import jax
import jax.numpy as jnp
from jax.experimental import pallas as pl
from jax.experimental.pallas import tpu as pltpu


def _round_up(n, m):
    return (n + m - 1) // m * m


def _vmem_budget_bytes():
    """Generation-aware VMEM budget: ~80% of physical per-core VMEM.

    ~102 MiB on v5e/v6e (128 MiB physical), ~51 MiB on v7x (64 MiB per TC).
    """
    cap = 128 * 1024 * 1024
    try:
        info = pltpu.get_tpu_info()
        cap = int(getattr(info, "vmem_capacity_bytes", cap))
    except Exception:
        pass
    return int(cap * 0.8)


def _swiglu_kernel(x_ref, wu_ref, wg_ref, wd_ref, o_ref, acc_ref):
    """One (tm, d_pad) token tile x one hidden chunk of width th.

    grid = (m_tiles, h_tiles); hidden is the innermost ("arbitrary") reduction axis.
      x_ref:   (tm, d_pad)  bf16 token tile, resident across the hidden axis
      wu_ref:  (d_pad, th)  bf16 up-projection chunk (streamed, double-buffered)
      wg_ref:  (d_pad, th)  bf16 gate-projection chunk
      wd_ref:  (th, d_pad)  bf16 down-projection chunk
      o_ref:   (tm, d_pad)  output tile (written once, on the last hidden chunk)
      acc_ref: (tm, d_pad)  f32 accumulator scratch
    """
    k = pl.program_id(1)

    @pl.when(k == 0)
    def _():
        acc_ref[...] = jnp.zeros_like(acc_ref)

    x = x_ref[...]
    up = jnp.dot(x, wu_ref[...], preferred_element_type=jnp.float32)
    gate = jnp.dot(x, wg_ref[...], preferred_element_type=jnp.float32)
    # SwiGLU epilogue in f32 on the VPU/EUP (safe on v5e, which lacks bf16 VPU/EUP).
    h = up * (gate * jax.nn.sigmoid(gate))
    acc_ref[...] += jnp.dot(h.astype(wd_ref.dtype), wd_ref[...],
                            preferred_element_type=jnp.float32)

    @pl.when(k == pl.num_programs(1) - 1)
    def _():
        o_ref[...] = acc_ref[...].astype(o_ref.dtype)


def prepare_swiglu_weights(w_up, w_gate, w_down, *, hidden_chunk=512,
                           compute_dtype=jnp.bfloat16):
    """Pad + cast weights ONCE (call at model init, not per forward).

    Weights are (in_features, out_features) = PyTorch nn.Linear.weight.T.
    Zero padding is mathematically inert through SwiGLU (up_pad = 0 kills the
    padded hidden columns; padded down rows contribute nothing).
    """
    d_model, hidden = w_up.shape
    d_pad = _round_up(d_model, 128)
    th = min(_round_up(hidden_chunk, 128), _round_up(hidden, 128))
    h_pad = _round_up(hidden, th)
    wu = jnp.pad(w_up, ((0, d_pad - d_model), (0, h_pad - hidden))).astype(compute_dtype)
    wg = jnp.pad(w_gate, ((0, d_pad - d_model), (0, h_pad - hidden))).astype(compute_dtype)
    wd = jnp.pad(w_down, ((0, h_pad - hidden), (0, d_pad - d_model))).astype(compute_dtype)
    return {"wu": wu, "wg": wg, "wd": wd,
            "d_model": d_model, "hidden": hidden,
            "d_pad": d_pad, "h_pad": h_pad, "th": th,
            "compute_dtype": compute_dtype}


def mlp_swiglu_apply(x, params, *, tm=512, out_dtype=None):
    """x: (batch, seq, d_model) -> (batch, seq, d_model)."""
    batch, seq, d_model = x.shape
    assert d_model == params["d_model"]
    d_pad, h_pad, th = params["d_pad"], params["h_pad"], params["th"]
    hidden = params["hidden"]
    cdt = params["compute_dtype"]
    out_dtype = out_dtype if out_dtype is not None else x.dtype
    out_itemsize = jnp.dtype(out_dtype).itemsize
    M = batch * seq

    # Token tile: multiple of 16 (bf16 sublane packing); shrunk for tiny inputs.
    tm_eff = min(_round_up(tm, 16), _round_up(M, 16))

    # Generation-aware VMEM budget; shrink tm until the working set fits.
    budget = _vmem_budget_bytes()

    def vmem_est(tm_):
        return (2 * tm_ * d_pad * 2                 # x tile, double-buffered, bf16
                + 2 * 3 * d_pad * th * 2            # up/gate/down chunks, double-buffered
                + 2 * tm_ * d_pad * out_itemsize    # output tile, double-buffered
                + tm_ * d_pad * 4                   # f32 accumulator scratch
                + 3 * tm_ * th * 4                  # up/gate/h f32 intermediates
                + (8 << 20))                        # compiler headroom

    while vmem_est(tm_eff) > budget and tm_eff > 64:
        tm_eff = max(64, tm_eff // 2)
    vmem_limit = int(min(budget, max(32 << 20, vmem_est(tm_eff))))

    m_pad = _round_up(M, tm_eff)
    x2d = x.reshape(M, d_model)
    if m_pad != M or d_pad != d_model:
        x2d = jnp.pad(x2d, ((0, m_pad - M), (0, d_pad - d_model)))
    x_p = x2d.astype(cdt) if x2d.dtype != cdt else x2d

    grid = (m_pad // tm_eff, h_pad // th)

    # Advisory cost estimate on the unpadded math.
    cost = pl.CostEstimate(
        flops=6 * M * d_model * hidden,
        transcendentals=M * hidden,
        bytes_accessed=int(M * d_model * x.dtype.itemsize
                           + 3 * d_model * hidden * jnp.dtype(cdt).itemsize
                           + M * d_model * out_itemsize))

    out_p = pl.pallas_call(
        _swiglu_kernel,
        out_shape=jax.ShapeDtypeStruct((m_pad, d_pad), out_dtype),
        grid_spec=pltpu.PrefetchScalarGridSpec(
            num_scalar_prefetch=0,
            grid=grid,
            in_specs=[
                pl.BlockSpec((tm_eff, d_pad), lambda i, k: (i, 0)),  # x, resident over k
                pl.BlockSpec((d_pad, th), lambda i, k: (0, k)),      # up chunk
                pl.BlockSpec((d_pad, th), lambda i, k: (0, k)),      # gate chunk
                pl.BlockSpec((th, d_pad), lambda i, k: (k, 0)),      # down chunk
            ],
            out_specs=pl.BlockSpec((tm_eff, d_pad), lambda i, k: (i, 0)),
            scratch_shapes=[pltpu.VMEM((tm_eff, d_pad), jnp.float32)],
        ),
        compiler_params=pltpu.CompilerParams(
            dimension_semantics=("parallel", "arbitrary"),
            vmem_limit_bytes=vmem_limit),
        cost_estimate=cost,
    )(x_p, params["wu"], params["wg"], params["wd"])

    return out_p[:M, :d_model].reshape(batch, seq, d_model)


def mlp_swiglu(x, w_up, w_gate, w_down, **kw):
    """Convenience one-shot wrapper.  In a real model, call prepare_swiglu_weights
    once at init and reuse the params across forwards (avoids per-call weight re-pad)."""
    params = prepare_swiglu_weights(w_up, w_gate, w_down)
    return mlp_swiglu_apply(x, params, **kw)


if __name__ == "__main__":
    # Config mirroring the PyTorch module defaults: d_model=32, hidden_dim=None,
    # mlp_bias=False, mlp_dropout=None (dropout is identity).
    d_model = 32
    hidden_dim = 4 * int(2 * d_model / 3)
    hidden_dim = 4 * ((hidden_dim + 4 - 1) // 4)   # -> 84
    batch, seq = 2, 8

    key = jax.random.PRNGKey(0)
    kx, ku, kg, kd = jax.random.split(key, 4)

    x = jax.random.normal(kx, (batch, seq, d_model), dtype=jnp.float32)
    # Deterministic synthetic parameters (stored (in, out) == PyTorch weight.T).
    w_up = jax.random.normal(ku, (d_model, hidden_dim), dtype=jnp.float32) * 0.05
    w_gate = jax.random.normal(kg, (d_model, hidden_dim), dtype=jnp.float32) * 0.05
    w_down = jax.random.normal(kd, (hidden_dim, d_model), dtype=jnp.float32) * 0.05

    # Prepare (pad + cast) weights once, then apply.
    params = prepare_swiglu_weights(w_up, w_gate, w_down)
    out = jax.block_until_ready(mlp_swiglu_apply(x, params))
    assert out.shape == (batch, seq, d_model)

    x2d = x.reshape(-1, d_model)

    # Reference mirroring the kernel's bf16 MXU path (tight check).
    def ref_bf16(xf):
        xb = xf.astype(jnp.bfloat16)
        up = jnp.dot(xb, w_up.astype(jnp.bfloat16), preferred_element_type=jnp.float32)
        gate = jnp.dot(xb, w_gate.astype(jnp.bfloat16), preferred_element_type=jnp.float32)
        h = up * (gate * jax.nn.sigmoid(gate))
        return jnp.dot(h.astype(jnp.bfloat16), w_down.astype(jnp.bfloat16),
                       preferred_element_type=jnp.float32)

    ref_b = ref_bf16(x2d).reshape(out.shape).astype(out.dtype)
    assert jnp.allclose(out, ref_b, atol=2e-3, rtol=2e-3), "mismatch vs bf16 reference"

    # Pure-f32 reference (loose check, accounts for bf16 matmul rounding).
    def ref_f32(xf):
        up = xf @ w_up
        gate = xf @ w_gate
        return (up * (gate * jax.nn.sigmoid(gate))) @ w_down

    ref_f = ref_f32(x2d).reshape(out.shape)
    assert jnp.allclose(out, ref_f, atol=3e-2, rtol=3e-2), "mismatch vs f32 reference"

    print("KERNEL_OK")
</pallas_src>

<mosaic_0001>
module attributes {stable_mosaic.version = 11 : i64} {
  func.func @_swiglu_kernel(%arg0: i32, %arg1: i32, %arg2: memref<16x128xbf16, #tpu.memory_space<vmem>>, %arg3: memref<128x128xbf16, #tpu.memory_space<vmem>>, %arg4: memref<128x128xbf16, #tpu.memory_space<vmem>>, %arg5: memref<128x128xbf16, #tpu.memory_space<vmem>>, %arg6: memref<16x128xf32, #tpu.memory_space<vmem>>, %arg7: memref<16x128xf32, #tpu.memory_space<vmem>>) attributes {dimension_semantics = [#tpu.dimension_semantics<parallel>, #tpu.dimension_semantics<arbitrary>], iteration_bounds = array<i64: 1, 1>, scalar_prefetch = 0 : i64, scratch_operands = 1 : i64, tpu.core_type = #tpu.core_type<tc>, window_params = [{transform_indices = @transform_0, window_bounds = array<i64: 16, 128>}, {transform_indices = @transform_1, window_bounds = array<i64: 128, 128>}, {transform_indices = @transform_2, window_bounds = array<i64: 128, 128>}, {transform_indices = @transform_3, window_bounds = array<i64: 128, 128>}, {transform_indices = @transform_4, window_bounds = array<i64: 16, 128>}]} {
    %c0_i32 = arith.constant 0 : i32
    %0 = arith.cmpi eq, %arg1, %c0_i32 : i32
    %1 = arith.extui %0 : i1 to i32
    %c0_i32_0 = arith.constant 0 : i32
    %2 = arith.cmpi ne, %1, %c0_i32_0 : i32
    scf.if %2 {
      %cst_17 = arith.constant 0.000000e+00 : f32
      %24 = vector.broadcast %cst_17 : f32 to vector<16x128xf32>
      %c0_18 = arith.constant 0 : index
      %c0_19 = arith.constant 0 : index
      %25 = vector.load %arg7[%c0_18, %c0_19] : memref<16x128xf32, #tpu.memory_space<vmem>>, vector<16x128xf32>
      tpu.vector_store %arg7[%c0_18, %c0_19], %24 {strides = array<i32>} : memref<16x128xf32, #tpu.memory_space<vmem>>, vector<16x128xf32>,
    } else {
    }
    %c0 = arith.constant 0 : index
    %c0_1 = arith.constant 0 : index
    %3 = vector.load %arg2[%c0, %c0_1] : memref<16x128xbf16, #tpu.memory_space<vmem>>, vector<16x128xbf16>
    %c0_2 = arith.constant 0 : index
    %c0_3 = arith.constant 0 : index
    %4 = vector.load %arg3[%c0_2, %c0_3] : memref<128x128xbf16, #tpu.memory_space<vmem>>, vector<128x128xbf16>
    %cst = arith.constant dense<0.000000e+00> : vector<16x128xf32>
    %5 = tpu.matmul %3, %4, %cst {dimension_numbers = #tpu.dot_dimension_numbers<[1], [0], [0], [1], [0, 0, 1, 1], [], []>} : vector<16x128xbf16>, vector<128x128xbf16>, vector<16x128xf32> -> vector<16x128xf32>
    %c0_4 = arith.constant 0 : index
    %c0_5 = arith.constant 0 : index
    %6 = vector.load %arg4[%c0_4, %c0_5] : memref<128x128xbf16, #tpu.memory_space<vmem>>, vector<128x128xbf16>
    %cst_6 = arith.constant dense<0.000000e+00> : vector<16x128xf32>
    %7 = tpu.matmul %3, %6, %cst_6 {dimension_numbers = #tpu.dot_dimension_numbers<[1], [0], [0], [1], [0, 0, 1, 1], [], []>} : vector<16x128xbf16>, vector<128x128xbf16>, vector<16x128xf32> -> vector<16x128xf32>
    %8 = arith.negf %7 : vector<16x128xf32>
    %9 = math.exp %8 : vector<16x128xf32>
    %cst_7 = arith.constant 1.000000e+00 : f32
    %10 = vector.broadcast %cst_7 : f32 to vector<16x128xf32>
    %11 = arith.addf %10, %9 : vector<16x128xf32>
    %12 = arith.divf %10, %11 : vector<16x128xf32>
    %13 = arith.mulf %7, %12 : vector<16x128xf32>
    %14 = arith.mulf %5, %13 : vector<16x128xf32>
    %c0_8 = arith.constant 0 : index
    %c0_9 = arith.constant 0 : index
    %15 = vector.load %arg7[%c0_8, %c0_9] : memref<16x128xf32, #tpu.memory_space<vmem>>, vector<16x128xf32>
    %16 = arith.truncf %14 : vector<16x128xf32> to vector<16x128xbf16>
    %c0_10 = arith.constant 0 : index
    %c0_11 = arith.constant 0 : index
    %17 = vector.load %arg5[%c0_10, %c0_11] : memref<128x128xbf16, #tpu.memory_space<vmem>>, vector<128x128xbf16>
    %cst_12 = arith.constant dense<0.000000e+00> : vector<16x128xf32>
    %18 = tpu.matmul %16, %17, %cst_12 {dimension_numbers = #tpu.dot_dimension_numbers<[1], [0], [0], [1], [0, 0, 1, 1], [], []>} : vector<16x128xbf16>, vector<128x128xbf16>, vector<16x128xf32> -> vector<16x128xf32>
    %19 = arith.addf %15, %18 : vector<16x128xf32>
    %c0_13 = arith.constant 0 : index
    %c0_14 = arith.constant 0 : index
    %20 = vector.load %arg7[%c0_13, %c0_14] : memref<16x128xf32, #tpu.memory_space<vmem>>, vector<16x128xf32>
    tpu.vector_store %arg7[%c0_13, %c0_14], %19 {strides = array<i32>} : memref<16x128xf32, #tpu.memory_space<vmem>>, vector<16x128xf32>,
    %c0_i32_15 = arith.constant 0 : i32
    %21 = arith.cmpi eq, %arg1, %c0_i32_15 : i32
    %22 = arith.extui %21 : i1 to i32
    %c0_i32_16 = arith.constant 0 : i32
    %23 = arith.cmpi ne, %22, %c0_i32_16 : i32
    scf.if %23 {
      %c0_17 = arith.constant 0 : index
      %c0_18 = arith.constant 0 : index
      %24 = vector.load %arg7[%c0_17, %c0_18] : memref<16x128xf32, #tpu.memory_space<vmem>>, vector<16x128xf32>
      %c0_19 = arith.constant 0 : index
      %c0_20 = arith.constant 0 : index
      %25 = vector.load %arg6[%c0_19, %c0_20] : memref<16x128xf32, #tpu.memory_space<vmem>>, vector<16x128xf32>
      tpu.vector_store %arg6[%c0_19, %c0_20], %24 {strides = array<i32>} : memref<16x128xf32, #tpu.memory_space<vmem>>, vector<16x128xf32>,
    } else {
    }
    return
  }
  func.func @transform_0(%arg0: i32, %arg1: i32) -> (i32, i32) {
    %c0_i32 = arith.constant 0 : i32
    %c0_i32_0 = arith.constant 0 : i32
    return %arg0, %c0_i32 : i32, i32
  }
  func.func @transform_1(%arg0: i32, %arg1: i32) -> (i32, i32) {
    %c0_i32 = arith.constant 0 : i32
    %c0_i32_0 = arith.constant 0 : i32
    return %c0_i32, %arg1 : i32, i32
  }
  func.func @transform_2(%arg0: i32, %arg1: i32) -> (i32, i32) {
    %c0_i32 = arith.constant 0 : i32
    %c0_i32_0 = arith.constant 0 : i32
    return %c0_i32, %arg1 : i32, i32
  }
  func.func @transform_3(%arg0: i32, %arg1: i32) -> (i32, i32) {
    %c0_i32 = arith.constant 0 : i32
    %c0_i32_0 = arith.constant 0 : i32
    return %arg1, %c0_i32 : i32, i32
  }
  func.func @transform_4(%arg0: i32, %arg1: i32) -> (i32, i32) {
    %c0_i32 = arith.constant 0 : i32
    %c0_i32_0 = arith.constant 0 : i32
    return %arg0, %c0_i32 : i32, i32
  }
}

</mosaic_0001>

<llo_original>
// kernel: tpu_custom_call.1
$region0: #{tpu_custom_call.1}
  #allocation0 [shape = 'u32[]', space=smem, size = 0x4, offset = 0x4, fixed_abs, tag = 'smem constant byte address 0x4 - core index']
  #allocation1 [shape = 'u32[72,128]{1,0:T(1,128)}', space=vmem, size = 0x9000, scoped, tag = 'internal scratch']
  #allocation2 [shape = 'f32[16,128]{1,0:T(8,128)}', space=vmem, size = 0x2000, scoped, tag = 'scratch operand']
  %s0 = inlined_call_operand.hbm [shape: bf16[16,128], index: 0, kind: input, shape index: {}]
  %s1 = inlined_call_operand.hbm [shape: bf16[128,128], index: 1, kind: input, shape index: {}]
  %s2 = inlined_call_operand.hbm [shape: bf16[128,128], index: 2, kind: input, shape index: {}]
  %s3 = inlined_call_operand.hbm [shape: bf16[128,128], index: 3, kind: input, shape index: {}]
  %s4 = inlined_call_operand.hbm [shape: f32[16,128], index: 4, kind: output, shape index: {}]
  %s5 = sld [smem:[#allocation0]]
  $region50: #{tpu_custom_call.1} parent=0
    _
  %s7 = ssub.s32 1, %s5
  %s8 = scalar_select 0, %s7, %s5
  $region1: #{tpu_custom_call.1} parent=0
    #allocation3 [shape = 'u8[4096]{0}', space=vmem, size = 0x1000, scoped, tag = 'input window, operand 0, single buffered']
    #allocation4 [shape = 's32[1]{0}', space=sflag, size = 0x4, scoped, tag = 'scoped memory for tpu_custom_call.1']
    #allocation5 [shape = 's32[1]{0}', space=sflag, size = 0x4, scoped, tag = 'scoped memory for tpu_custom_call.1']
    #allocation6 [shape = 'u8[32768]{0}', space=vmem, size = 0x8000, scoped, tag = 'input window, operand 1, single buffered']
    #allocation7 [shape = 's32[1]{0}', space=sflag, size = 0x4, scoped, tag = 'scoped memory for tpu_custom_call.1']
    #allocation8 [shape = 'u8[32768]{0}', space=vmem, size = 0x8000, scoped, tag = 'input window, operand 2, single buffered']
    #allocation9 [shape = 'u8[32768]{0}', space=vmem, size = 0x8000, scoped, tag = 'input window, operand 3, single buffered']
    #allocation10 [shape = 's32[1]{0}', space=sflag, size = 0x4, scoped, tag = 'scoped memory for tpu_custom_call.1']
    #allocation11 [shape = 'u8[8192]{0}', space=vmem, size = 0x2000, scoped, tag = 'output window, operand 0, single buffered']
    %9 = vsyncpa [#allocation4], 0
    %10 = vsyncpa [#allocation7], 0
    %11 = vsyncpa [#allocation10], 0
    %12 = vsyncpa [#allocation5], 0
    // Predicated region
    $region2: #{tpu_custom_call.1} parent=1 // pred_check
      _
    $region3: #{tpu_custom_call.1} parent=1 // pred_check_branch
      %14 = sbr.rel (0) target = $region5
    $region4: #{tpu_custom_call.1} parent=1 // pred_region
      %16 = vsyncadd [#allocation4], 0
      %s17 = sshll.u32 %s0, 4
      %s18 = int_to_ptr.hbm [resolvable:$true] %s17
      %s19 = sshll.u32 [#allocation3], 4
      %s20 = int_to_ptr.vmem [resolvable:$true] %s19
      %25 = dma.hbm_to_vmem [thread:$0]  %s18, 128, %s20, [#allocation4], 64, 64, 4
    $region5: #{tpu_custom_call.1} parent=1 // pred_fallthru
      _
    // Predicated region
    $region6: #{tpu_custom_call.1} parent=1 // pred_check
      _
    $region7: #{tpu_custom_call.1} parent=1 // pred_check_branch
      %27 = sbr.rel (0) target = $region9
    $region8: #{tpu_custom_call.1} parent=1 // pred_region
      %29 = vsyncadd [#allocation7], 0
      %s30 = sshll.u32 %s1, 4
      %s31 = int_to_ptr.hbm [resolvable:$true] %s30
      %s32 = sshll.u32 [#allocation6], 4
      %s33 = int_to_ptr.vmem [resolvable:$true] %s32
      %38 = dma.hbm_to_vmem [thread:$0]  %s31, 1024, %s33, [#allocation7], 64, 64, 4
    $region9: #{tpu_custom_call.1} parent=1 // pred_fallthru
      _
    // Predicated region
    $region10: #{tpu_custom_call.1} parent=1 // pred_check
      _
    $region11: #{tpu_custom_call.1} parent=1 // pred_check_branch
      %40 = sbr.rel (0) target = $region13
    $region12: #{tpu_custom_call.1} parent=1 // pred_region
      %42 = vsyncadd [#allocation7], 0
      %s43 = sshll.u32 %s2, 4
      %s44 = int_to_ptr.hbm [resolvable:$true] %s43
      %s45 = sshll.u32 [#allocation8], 4
      %s46 = int_to_ptr.vmem [resolvable:$true] %s45
      %51 = dma.hbm_to_vmem [thread:$0]  %s44, 1024, %s46, [#allocation7], 64, 64, 4
    $region13: #{tpu_custom_call.1} parent=1 // pred_fallthru
      _
    // Predicated region
    $region14: #{tpu_custom_call.1} parent=1 // pred_check
      _
    $region15: #{tpu_custom_call.1} parent=1 // pred_check_branch
      %53 = sbr.rel (0) target = $region17
    $region16: #{tpu_custom_call.1} parent=1 // pred_region
      %55 = vsyncadd [#allocation10], 0
      %s56 = sshll.u32 %s3, 4
      %s57 = int_to_ptr.hbm [resolvable:$true] %s56
      %s58 = sshll.u32 [#allocation9], 4
      %s59 = int_to_ptr.vmem [resolvable:$true] %s58
      %64 = dma.hbm_to_vmem [thread:$0]  %s57, 1024, %s59, [#allocation10], 64, 64, 4
    $region17: #{tpu_custom_call.1} parent=1 // pred_fallthru
      _
    // Predicated region
    $region18: #{tpu_custom_call.1} parent=1 // pred_check
      _
    $region19: #{tpu_custom_call.1} parent=1 // pred_check_branch
      %66 = sbr.rel (0) target = $region21
    $region20: #{tpu_custom_call.1} parent=1 // pred_region
      %68 = dma.done [#allocation4], 128
    $region21: #{tpu_custom_call.1} parent=1 // pred_fallthru
      _
    // Predicated region
    $region22: #{tpu_custom_call.1} parent=1 // pred_check
      _
    $region23: #{tpu_custom_call.1} parent=1 // pred_check_branch
      %70 = sbr.rel (0) target = $region25
    $region24: #{tpu_custom_call.1} parent=1 // pred_region
      %72 = dma.done [#allocation7], 1024
    $region25: #{tpu_custom_call.1} parent=1 // pred_fallthru
      _
    // Predicated region
    $region26: #{tpu_custom_call.1} parent=1 // pred_check
      _
    $region27: #{tpu_custom_call.1} parent=1 // pred_check_branch
      %74 = sbr.rel (0) target = $region29
    $region28: #{tpu_custom_call.1} parent=1 // pred_region
      %76 = dma.done [#allocation7], 1024
    $region29: #{tpu_custom_call.1} parent=1 // pred_fallthru
      _
    // Predicated region
    $region30: #{tpu_custom_call.1} parent=1 // pred_check
      _
    $region31: #{tpu_custom_call.1} parent=1 // pred_check_branch
      %78 = sbr.rel (0) target = $region33
    $region32: #{tpu_custom_call.1} parent=1 // pred_region
      %80 = dma.done [#allocation10], 1024
    $region33: #{tpu_custom_call.1} parent=1 // pred_fallthru
      _
    %p81 = scmp.eq.s32.totalorder 0, 0
    // Predicated region
    $region34: #{tpu_custom_call.1} parent=1 // pred_check
      %p82 = pneg %p81
    $region35: #{tpu_custom_call.1} parent=1 // pred_check_branch
      %84 = sbr.rel (%p82) target = $region37
    $region36: #{tpu_custom_call.1} parent=1 // pred_region
      %85 = vst [vmem:[#allocation2] sm:$0xff] 0.0
      %86 = vst [vmem:[#allocation2 + $0x8] sm:$0xff] 0.0
    $region37: #{tpu_custom_call.1} parent=1 // pred_fallthru
      _
    %v87 = vld [vmem:[#allocation3] sm:$0xf]
    %v88 = vld [vmem:[#allocation3 + $0x4] sm:$0xf]
    %v89 = vld [vmem:[#allocation6] sm:$0xf]
    %v90 = vld [vmem:[#allocation6 + $0x4] sm:$0xf]
    %v91 = vld [vmem:[#allocation6 + $0x8] sm:$0xf]
    %v92 = vld [vmem:[#allocation6 + $0xc] sm:$0xf]
    %v93 = vld [vmem:[#allocation6 + $0x10] sm:$0xf]
    %v94 = vld [vmem:[#allocation6 + $0x14] sm:$0xf]
    %v95 = vld [vmem:[#allocation6 + $0x18] sm:$0xf]
    %v96 = vld [vmem:[#allocation6 + $0x1c] sm:$0xf]
    %v97 = vld [vmem:[#allocation6 + $0x20] sm:$0xf]
    %v98 = vld [vmem:[#allocation6 + $0x24] sm:$0xf]
    %v99 = vld [vmem:[#allocation6 + $0x28] sm:$0xf]
    %v100 = vld [vmem:[#allocation6 + $0x2c] sm:$0xf]
    %v101 = vld [vmem:[#allocation6 + $0x30] sm:$0xf]
    %v102 = vld [vmem:[#allocation6 + $0x34] sm:$0xf]
    %v103 = vld [vmem:[#allocation6 + $0x38] sm:$0xf]
    %v104 = vld [vmem:[#allocation6 + $0x3c] sm:$0xf]
    %v107 = vunpack.c.l.b16 %v87
    %v108 = vunpack.c.l.b16 %v88
    %v109 = vpack.c.b16 %v108, %v107
    %v127 = vunpack.c.l.b16 %v89
    %v128 = vunpack.c.l.b16 %v90
    %v129 = vunpack.c.l.b16 %v91
    %v130 = vunpack.c.l.b16 %v92
    %v131 = vunpack.c.l.b16 %v93
    %v132 = vunpack.c.l.b16 %v94
    %v133 = vunpack.c.l.b16 %v95
    %v134 = vunpack.c.l.b16 %v96
    %v135 = vunpack.c.l.b16 %v97
    %v136 = vunpack.c.l.b16 %v98
    %v137 = vunpack.c.l.b16 %v99
    %v138 = vunpack.c.l.b16 %v100
    %v139 = vunpack.c.l.b16 %v101
    %v140 = vunpack.c.l.b16 %v102
    %v141 = vunpack.c.l.b16 %v103
    %v142 = vunpack.c.l.b16 %v104
    %v143 = vpack.c.b16 %v128, %v127
    %v144 = vpack.c.b16 %v130, %v129
    %v145 = vpack.c.b16 %v132, %v131
    %v146 = vpack.c.b16 %v134, %v133
    %v147 = vpack.c.b16 %v136, %v135
    %v148 = vpack.c.b16 %v138, %v137
    %v149 = vpack.c.b16 %v140, %v139
    %v150 = vpack.c.b16 %v142, %v141
    %159 = vmatpush.bf16.msra.mxu0 %v150
    %160 = vmatpush.bf16.msra.mxu0 %v149
    %161 = vmatpush.bf16.msra.mxu0 %v148
    %162 = vmatpush.bf16.msra.mxu0 %v147
    %163 = vmatpush.bf16.msra.mxu0 %v146
    %164 = vmatpush.bf16.msra.mxu0 %v145
    %165 = vmatpush.bf16.msra.mxu0 %v144
    %166 = vmatpush.bf16.msra.mxu0 %v143
    %167 = vmatmul.bf16.gmra.mxu0 %v109
    %v168 = vpop.f32.mrf.mxu0
    %v169 = vadd.f32 0.0, %v168
    %v170 = vpop.f32.mrf.mxu0
    %v171 = vadd.f32 0.0, %v170
    %172 = vdwg.mxu0
    %v173 = vld [vmem:[#allocation8] sm:$0xf]
    %v174 = vld [vmem:[#allocation8 + $0x4] sm:$0xf]
    %v175 = vld [vmem:[#allocation8 + $0x8] sm:$0xf]
    %v176 = vld [vmem:[#allocation8 + $0xc] sm:$0xf]
    %v177 = vld [vmem:[#allocation8 + $0x10] sm:$0xf]
    %v178 = vld [vmem:[#allocation8 + $0x14] sm:$0xf]
    %v179 = vld [vmem:[#allocation8 + $0x18] sm:$0xf]
    %v180 = vld [vmem:[#allocation8 + $0x1c] sm:$0xf]
    %v181 = vld [vmem:[#allocation8 + $0x20] sm:$0xf]
    %v182 = vld [vmem:[#allocation8 + $0x24] sm:$0xf]
    %v183 = vld [vmem:[#allocation8 + $0x28] sm:$0xf]
    %v184 = vld [vmem:[#allocation8 + $0x2c] sm:$0xf]
    %v185 = vld [vmem:[#allocation8 + $0x30] sm:$0xf]
    %v186 = vld [vmem:[#allocation8 + $0x34] sm:$0xf]
    %v187 = vld [vmem:[#allocation8 + $0x38] sm:$0xf]
    %v188 = vld [vmem:[#allocation8 + $0x3c] sm:$0xf]
    %v205 = vunpack.c.l.b16 %v173
    %v206 = vunpack.c.l.b16 %v174
    %v207 = vunpack.c.l.b16 %v175
    %v208 = vunpack.c.l.b16 %v176
    %v209 = vunpack.c.l.b16 %v177
    %v210 = vunpack.c.l.b16 %v178
    %v211 = vunpack.c.l.b16 %v179
    %v212 = vunpack.c.l.b16 %v180
    %v213 = vunpack.c.l.b16 %v181
    %v214 = vunpack.c.l.b16 %v182
    %v215 = vunpack.c.l.b16 %v183
    %v216 = vunpack.c.l.b16 %v184
    %v217 = vunpack.c.l.b16 %v185
    %v218 = vunpack.c.l.b16 %v186
    %v219 = vunpack.c.l.b16 %v187
    %v220 = vunpack.c.l.b16 %v188
    %v221 = vpack.c.b16 %v206, %v205
    %v222 = vpack.c.b16 %v208, %v207
    %v223 = vpack.c.b16 %v210, %v209
    %v224 = vpack.c.b16 %v212, %v211
    %v225 = vpack.c.b16 %v214, %v213
    %v226 = vpack.c.b16 %v216, %v215
    %v227 = vpack.c.b16 %v218, %v217
    %v228 = vpack.c.b16 %v220, %v219
    %237 = vmatpush.bf16.msra.mxu0 %v228
    %238 = vmatpush.bf16.msra.mxu0 %v227
    %239 = vmatpush.bf16.msra.mxu0 %v226
    %240 = vmatpush.bf16.msra.mxu0 %v225
    %241 = vmatpush.bf16.msra.mxu0 %v224
    %242 = vmatpush.bf16.msra.mxu0 %v223
    %243 = vmatpush.bf16.msra.mxu0 %v222
    %244 = vmatpush.bf16.msra.mxu0 %v221
    %245 = vmatmul.bf16.gmra.mxu0 %v109
    %v246 = vpop.f32.mrf.mxu0
    %v247 = vadd.f32 0.0, %v246
    %v248 = vpop.f32.mrf.mxu0
    %v249 = vadd.f32 0.0, %v248
    %250 = vdwg.mxu0
    %v251 = vxor.u32 %v247, 2147483648
    %v252 = vxor.u32 %v249, 2147483648
    %v253 = vmul.f32 %v251, 1.442695
    %v254 = vpow.pop %v253
    %v255 = vmul.f32 %v252, 1.442695
    %v256 = vpow.pop %v255
    %v257 = vadd.f32 %v254, 1.0
    %v258 = vadd.f32 %v256, 1.0
    %v259 = vrcp.pop %v257
    %v260 = vmul.f32 %v257, %v259
    %v261 = vsub.f32 1.0, %v260
    %v262 = vmul.f32 %v259, %v261
    %v263 = vadd.f32 %v259, %v262
    %vm264 = vweird.f32 %v257
    %vm265 = vweird.f32 %v259
    %vm266 = vmor %vm264, %vm265
    %v267 = vsel %vm266, %v259, %v263
    %v268 = vand.u32 2147483647, %v257
    %vm269 = vcmp.eq.f32.partialorder %v268, 8.507059e+37
    %v270 = vand.u32 %v257, 2147483648
    %v271 = vor.u32 1.1754944e-38, %v270
    %v272 = vsel %vm269, %v271, %v267
    %v273 = vmul.f32 1.0, %v272
    %v274 = vrcp.pop %v258
    %v275 = vmul.f32 %v258, %v274
    %v276 = vsub.f32 1.0, %v275
    %v277 = vmul.f32 %v274, %v276
    %v278 = vadd.f32 %v274, %v277
    %vm279 = vweird.f32 %v258
    %vm280 = vweird.f32 %v274
    %vm281 = vmor %vm279, %vm280
    %v282 = vsel %vm281, %v274, %v278
    %v283 = vand.u32 2147483647, %v258
    %vm284 = vcmp.eq.f32.partialorder %v283, 8.507059e+37
    %v285 = vand.u32 %v258, 2147483648
    %v286 = vor.u32 1.1754944e-38, %v285
    %v287 = vsel %vm284, %v286, %v282
    %v288 = vmul.f32 1.0, %v287
    %v289 = vmul.f32 %v247, %v273
    %v290 = vmul.f32 %v249, %v288
    %v291 = vmul.f32 %v169, %v289
    %v292 = vmul.f32 %v171, %v290
    %v293 = vld [vmem:[#allocation2] sm:$0xff]
    %v294 = vld [vmem:[#allocation2 + $0x8] sm:$0xff]
    %v295 = vpack.c.bf16 %v292, %v291
    %v296 = vld [vmem:[#allocation9] sm:$0xf]
    %v297 = vld [vmem:[#allocation9 + $0x4] sm:$0xf]
    %v298 = vld [vmem:[#allocation9 + $0x8] sm:$0xf]
    %v299 = vld [vmem:[#allocation9 + $0xc] sm:$0xf]
    %v300 = vld [vmem:[#allocation9 + $0x10] sm:$0xf]
    %v301 = vld [vmem:[#allocation9 + $0x14] sm:$0xf]
    %v302 = vld [vmem:[#allocation9 + $0x18] sm:$0xf]
    %v303 = vld [vmem:[#allocation9 + $0x1c] sm:$0xf]
    %v304 = vld [vmem:[#allocation9 + $0x20] sm:$0xf]
    %v305 = vld [vmem:[#allocation9 + $0x24] sm:$0xf]
    %v306 = vld [vmem:[#allocation9 + $0x28] sm:$0xf]
    %v307 = vld [vmem:[#allocation9 + $0x2c] sm:$0xf]
    %v308 = vld [vmem:[#allocation9 + $0x30] sm:$0xf]
    %v309 = vld [vmem:[#allocation9 + $0x34] sm:$0xf]
    %v310 = vld [vmem:[#allocation9 + $0x38] sm:$0xf]
    %v311 = vld [vmem:[#allocation9 + $0x3c] sm:$0xf]
    %v328 = vunpack.c.l.b16 %v296
    %v329 = vunpack.c.l.b16 %v297
    %v330 = vunpack.c.l.b16 %v298
    %v331 = vunpack.c.l.b16 %v299
    %v332 = vunpack.c.l.b16 %v300
    %v333 = vunpack.c.l.b16 %v301
    %v334 = vunpack.c.l.b16 %v302
    %v335 = vunpack.c.l.b16 %v303
    %v336 = vunpack.c.l.b16 %v304
    %v337 = vunpack.c.l.b16 %v305
    %v338 = vunpack.c.l.b16 %v306
    %v339 = vunpack.c.l.b16 %v307
    %v340 = vunpack.c.l.b16 %v308
    %v341 = vunpack.c.l.b16 %v309
    %v342 = vunpack.c.l.b16 %v310
    %v343 = vunpack.c.l.b16 %v311
    %v344 = vpack.c.b16 %v329, %v328
    %v345 = vpack.c.b16 %v331, %v330
    %v346 = vpack.c.b16 %v333, %v332
    %v347 = vpack.c.b16 %v335, %v334
    %v348 = vpack.c.b16 %v337, %v336
    %v349 = vpack.c.b16 %v339, %v338
    %v350 = vpack.c.b16 %v341, %v340
    %v351 = vpack.c.b16 %v343, %v342
    %360 = vmatpush.bf16.msra.mxu0 %v351
    %361 = vmatpush.bf16.msra.mxu0 %v350
    %362 = vmatpush.bf16.msra.mxu0 %v349
    %363 = vmatpush.bf16.msra.mxu0 %v348
    %364 = vmatpush.bf16.msra.mxu0 %v347
    %365 = vmatpush.bf16.msra.mxu0 %v346
    %366 = vmatpush.bf16.msra.mxu0 %v345
    %367 = vmatpush.bf16.msra.mxu0 %v344
    %368 = vmatmul.bf16.gmra.mxu0 %v295
    %v369 = vpop.f32.mrf.mxu0
    %v370 = vadd.f32 0.0, %v369
    %v371 = vpop.f32.mrf.mxu0
    %v372 = vadd.f32 0.0, %v371
    %373 = vdwg.mxu0
    %v374 = vadd.f32 %v293, %v370
    %v375 = vadd.f32 %v294, %v372
    %376 = vst [vmem:[#allocation2] sm:$0xff] %v374
    %377 = vst [vmem:[#allocation2 + $0x8] sm:$0xff] %v375
    // Predicated region
    $region38: #{tpu_custom_call.1} parent=1 // pred_check
      %p378 = pneg %p81
    $region39: #{tpu_custom_call.1} parent=1 // pred_check_branch
      %380 = sbr.rel (%p378) target = $region41
    $region40: #{tpu_custom_call.1} parent=1 // pred_region
      %v381 = vld [vmem:[#allocation2] sm:$0xff]
      %v382 = vld [vmem:[#allocation2 + $0x8] sm:$0xff]
      %383 = vst [vmem:[#allocation11] sm:$0xff] %v381
      %384 = vst [vmem:[#allocation11 + $0x8] sm:$0xff] %v382
    $region41: #{tpu_custom_call.1} parent=1 // pred_fallthru
      _
    // Predicated region
    $region42: #{tpu_custom_call.1} parent=1 // pred_check
      _
    $region43: #{tpu_custom_call.1} parent=1 // pred_check_branch
      %386 = sbr.rel (0) target = $region45
    $region44: #{tpu_custom_call.1} parent=1 // pred_region
      %388 = vsyncadd [#allocation5], 0
      %s389 = sshll.u32 [#allocation11], 4
      %s390 = int_to_ptr.vmem [resolvable:$true] %s389
      %s391 = sshll.u32 %s4, 4
      %s392 = int_to_ptr.hbm [resolvable:$true] %s391
      %397 = dma.vmem_to_hbm [thread:$0]  %s390, 256, %s392, [#allocation5], 128, 128, 8
    $region45: #{tpu_custom_call.1} parent=1 // pred_fallthru
      _
    // Predicated region
    $region46: #{tpu_custom_call.1} parent=1 // pred_check
      _
    $region47: #{tpu_custom_call.1} parent=1 // pred_check_branch
      %399 = sbr.rel (0) target = $region49
    $region48: #{tpu_custom_call.1} parent=1 // pred_region
      %401 = dma.done [#allocation5], 256
    $region49: #{tpu_custom_call.1} parent=1 // pred_fallthru
      _
    %402 = vsyncpa [#allocation4], 1
    %403 = vsyncpa [#allocation7], 1
    %404 = vsyncpa [#allocation10], 1
    %405 = vsyncpa [#allocation5], 1

</llo_original>
